<compile_context>
chip_gen: v6e
topology: v6e:2x2x1
jax: 0.10.0
libtpu: 0.0.40
codegen_flags: <defaults>
</compile_context>

<pallas_src>
import math
import jax
import jax.numpy as jnp
from jax.experimental import pallas as pl
from jax.experimental.pallas import tpu as pltpu


def _cdiv(a, b):
    return (a + b - 1) // b


def _round_up(a, b):
    return _cdiv(a, b) * b


# ---------------------------------------------------------------------------
# Pallas kernel: per (batch, M-tile) fused "unfold + matmul + bias"
# ---------------------------------------------------------------------------
def _make_conv_kernel(K: int, TM: int):
    def kernel(x_ref, w_ref, b_ref, o_ref):
        # x_ref: (1, 1, K*Cin, TM + K - 1)  bf16  row-shifted input tile (+ kw halo)
        # w_ref: (K, Cout_pad, K*Cin)       bf16  weight, kw-major, resident
        # b_ref: (Cout_pad, 1)              f32   bias
        # o_ref: (1, Cout_pad, TM)          f32   output tile (channels x flat spatial)
        acc = jnp.dot(w_ref[0], x_ref[0, 0, :, 0:TM],
                      preferred_element_type=jnp.float32)
        for kw in range(1, K):                      # static unroll, K*K folded into K dots
            acc = acc + jnp.dot(w_ref[kw], x_ref[0, 0, :, kw:kw + TM],
                                preferred_element_type=jnp.float32)
        o_ref[0] = acc + b_ref[...]                 # bias broadcast over lanes
    return kernel


# ---------------------------------------------------------------------------
# Wrapper: Conv2d forward (padding, stride), NCHW in / NCHW out
# ---------------------------------------------------------------------------
def conv2d_pallas(x, weight, bias, padding=0, stride=1, *, tile_m=256,
                  compute_dtype=jnp.bfloat16):
    B, Cin, H, W = x.shape
    Cout, Cin_w, K, K_w = weight.shape
    assert Cin_w == Cin and K_w == K
    Hp, Wp = H + 2 * padding, W + 2 * padding
    OH = (Hp - K) // stride + 1
    OW = (Wp - K) // stride + 1
    KC = K * Cin

    # ---- glue (cheap: K-fold row-shift stack, bf16, no transposes) ----
    xp = jnp.pad(x, ((0, 0), (0, 0), (padding, padding), (padding, padding)))
    xp = xp.astype(compute_dtype)
    # rows[b, kh, ci, oh, :] = xp[b, ci, oh*stride + kh, :]
    rows = jnp.stack([xp[:, :, kh:kh + stride * OH:stride, :] for kh in range(K)],
                     axis=1)                                  # [B, K, Cin, OH, Wp]
    flat = rows.reshape(B, KC, OH * Wp)                       # free reshape

    M_full = OH * Wp
    TM = _round_up(max(128, min(tile_m, _round_up(M_full, 128))), 128)
    n_tiles = _cdiv(M_full, TM)
    L_tile = TM + K - 1                                       # kw halo
    flat = jnp.pad(flat, ((0, 0), (0, 0), (0, n_tiles * TM + K - 1 - M_full)))
    # wrapper-side M tiling with a (K-1)-column halo so in-kernel kw slices
    # stay inside the block (overlap cost ~ (K-1)/TM, negligible).
    x_tiles = jnp.stack([flat[:, :, t * TM:t * TM + L_tile] for t in range(n_tiles)],
                        axis=1)                               # [B, n_tiles, KC, L_tile]

    Cpad = _round_up(Cout, 8)
    # weight[co, ci, kh, kw] -> w_r[kw, co, kh*Cin + ci]  (matches rows layout)
    w_r = jnp.transpose(weight, (3, 0, 2, 1)).reshape(K, Cout, KC)
    w_r = jnp.pad(w_r, ((0, 0), (0, Cpad - Cout), (0, 0))).astype(compute_dtype)
    b_r = jnp.pad(bias, (0, Cpad - Cout)).reshape(Cpad, 1).astype(jnp.float32)

    # ---- VMEM budget + cost estimate ----
    in_blk = KC * L_tile * 2
    out_blk = Cpad * TM * 4
    vmem_need = 2 * (in_blk + out_blk) + K * Cpad * KC * 2 + Cpad * 4
    vmem_limit = int(min(96 << 20, max(32 << 20, 4 * vmem_need)))
    cost = pl.CostEstimate(
        flops=int(2 * B * n_tiles * K * Cpad * KC * TM),
        transcendentals=0,
        bytes_accessed=int(x_tiles.size * 2 + w_r.size * 2 + b_r.size * 4
                           + B * Cpad * n_tiles * TM * 4),
    )

    kernel = _make_conv_kernel(K, TM)
    out = pl.pallas_call(
        kernel,
        out_shape=jax.ShapeDtypeStruct((B, Cpad, n_tiles * TM), jnp.float32),
        grid=(B, n_tiles),
        in_specs=[
            pl.BlockSpec((1, 1, KC, L_tile), lambda b, t: (b, t, 0, 0)),
            pl.BlockSpec((K, Cpad, KC),      lambda b, t: (0, 0, 0)),   # resident
            pl.BlockSpec((Cpad, 1),          lambda b, t: (0, 0)),      # resident
        ],
        out_specs=pl.BlockSpec((1, Cpad, TM), lambda b, t: (b, 0, t)),
        compiler_params=pltpu.CompilerParams(
            dimension_semantics=("parallel", "parallel"),
            vmem_limit_bytes=vmem_limit),
        cost_estimate=cost,
    )(x_tiles, w_r, b_r)

    # ---- fold back to NCHW: slice + reshape only (no transpose) ----
    out = out[:, :Cout, :M_full].reshape(B, Cout, OH, Wp)
    out = out[:, :, :, 0:(OW - 1) * stride + 1:stride]        # keep valid W columns
    return out


# ---------------------------------------------------------------------------
# Deterministic parameter init (PyTorch reset_parameters semantics)
# ---------------------------------------------------------------------------
def init_conv_params(key, in_channels, out_channels, kernel_size):
    kw, kb = jax.random.split(key)
    fan_in = in_channels * kernel_size * kernel_size
    bound = 1.0 / math.sqrt(fan_in)   # kaiming_uniform_(a=sqrt(5)) equivalent
    weight = jax.random.uniform(
        kw, (out_channels, in_channels, kernel_size, kernel_size),
        dtype=jnp.float32, minval=-bound, maxval=bound)
    bias = jax.random.uniform(
        kb, (out_channels,), dtype=jnp.float32, minval=-bound, maxval=bound)
    return weight, bias


if __name__ == "__main__":
    key = jax.random.PRNGKey(0)
    k_x, k_p = jax.random.split(key)

    B, Cin, H, W = 2, 4, 16, 16
    Cout, K = 8, 3
    padding, stride = 1, 1

    x = jax.random.normal(k_x, (B, Cin, H, W), dtype=jnp.float32)
    weight, bias = init_conv_params(k_p, Cin, Cout, K)

    out = conv2d_pallas(x, weight, bias, padding=padding, stride=stride)
    out = jax.block_until_ready(out)

    OH = (H + 2 * padding - K) // stride + 1
    OW = (W + 2 * padding - K) // stride + 1
    assert out.shape == (B, Cout, OH, OW)

    def conv_ref(a, w):
        return jax.lax.conv_general_dilated(
            a, w, window_strides=(stride, stride),
            padding=[(padding, padding), (padding, padding)],
            dimension_numbers=("NCHW", "OIHW", "NCHW"),
            precision=jax.lax.Precision.HIGHEST)

    # Strict check: same bf16-quantized operands -> only f32 accumulation-order noise.
    xq = x.astype(jnp.bfloat16).astype(jnp.float32)
    wq = weight.astype(jnp.bfloat16).astype(jnp.float32)
    ref_q = conv_ref(xq, wq) + bias.reshape(1, Cout, 1, 1)
    assert jnp.allclose(out, ref_q, atol=1e-4, rtol=1e-4), "mismatch vs bf16-quantized reference"

    # Sanity check vs the exact f32 module semantics (bf16 MXU inputs => ~1e-2 error).
    ref = conv_ref(x, weight) + bias.reshape(1, Cout, 1, 1)
    assert jnp.allclose(out, ref, atol=1e-1, rtol=5e-2), "mismatch vs f32 reference"

    print("KERNEL_OK")
</pallas_src>

<mosaic_0001>
module attributes {stable_mosaic.version = 11 : i64} {
  func.func @kernel(%arg0: i32, %arg1: i32, %arg2: memref<1x1x12x258xbf16, #tpu.memory_space<vmem>>, %arg3: memref<3x8x12xbf16, #tpu.memory_space<vmem>>, %arg4: memref<8x1xf32, #tpu.memory_space<vmem>>, %arg5: memref<1x8x256xf32, #tpu.memory_space<vmem>>) attributes {dimension_semantics = [#tpu.dimension_semantics<parallel>, #tpu.dimension_semantics<parallel>], iteration_bounds = array<i64: 2, 2>, scalar_prefetch = 0 : i64, scratch_operands = 0 : i64, tpu.core_type = #tpu.core_type<tc>, window_params = [{transform_indices = @transform_0, window_bounds = array<i64: 1, 1, 12, 258>}, {pipeline_mode = #tpu.pipeline_mode<synchronous>, transform_indices = @transform_1, window_bounds = array<i64: 3, 8, 12>}, {pipeline_mode = #tpu.pipeline_mode<synchronous>, transform_indices = @transform_2, window_bounds = array<i64: 8, 1>}, {transform_indices = @transform_3, window_bounds = array<i64: 1, 8, 256>}]} {
    %c0 = arith.constant 0 : index
    %c0_0 = arith.constant 0 : index
    %c0_1 = arith.constant 0 : index
    %0 = vector.load %arg3[%c0, %c0_0, %c0_1] : memref<3x8x12xbf16, #tpu.memory_space<vmem>>, vector<1x8x12xbf16>
    %1 = vector.shape_cast %0 : vector<1x8x12xbf16> to vector<8x12xbf16>
    %c0_2 = arith.constant 0 : index
    %c0_3 = arith.constant 0 : index
    %c0_4 = arith.constant 0 : index
    %c0_5 = arith.constant 0 : index
    %2 = vector.load %arg2[%c0_2, %c0_3, %c0_4, %c0_5] : memref<1x1x12x258xbf16, #tpu.memory_space<vmem>>, vector<1x1x12x256xbf16>
    %3 = vector.shape_cast %2 : vector<1x1x12x256xbf16> to vector<12x256xbf16>
    %cst = arith.constant dense<0.000000e+00> : vector<8x256xf32>
    %4 = tpu.matmul %1, %3, %cst {dimension_numbers = #tpu.dot_dimension_numbers<[1], [0], [0], [1], [0, 0, 1, 1], [], []>} : vector<8x12xbf16>, vector<12x256xbf16>, vector<8x256xf32> -> vector<8x256xf32>
    %c1 = arith.constant 1 : index
    %c0_6 = arith.constant 0 : index
    %c0_7 = arith.constant 0 : index
    %5 = vector.load %arg3[%c1, %c0_6, %c0_7] : memref<3x8x12xbf16, #tpu.memory_space<vmem>>, vector<1x8x12xbf16>
    %6 = vector.shape_cast %5 : vector<1x8x12xbf16> to vector<8x12xbf16>
    %c0_8 = arith.constant 0 : index
    %c0_9 = arith.constant 0 : index
    %c0_10 = arith.constant 0 : index
    %c1_11 = arith.constant 1 : index
    %7 = vector.load %arg2[%c0_8, %c0_9, %c0_10, %c1_11] : memref<1x1x12x258xbf16, #tpu.memory_space<vmem>>, vector<1x1x12x256xbf16>
    %8 = vector.shape_cast %7 : vector<1x1x12x256xbf16> to vector<12x256xbf16>
    %cst_12 = arith.constant dense<0.000000e+00> : vector<8x256xf32>
    %9 = tpu.matmul %6, %8, %cst_12 {dimension_numbers = #tpu.dot_dimension_numbers<[1], [0], [0], [1], [0, 0, 1, 1], [], []>} : vector<8x12xbf16>, vector<12x256xbf16>, vector<8x256xf32> -> vector<8x256xf32>
    %10 = arith.addf %4, %9 : vector<8x256xf32>
    %c2 = arith.constant 2 : index
    %c0_13 = arith.constant 0 : index
    %c0_14 = arith.constant 0 : index
    %11 = vector.load %arg3[%c2, %c0_13, %c0_14] : memref<3x8x12xbf16, #tpu.memory_space<vmem>>, vector<1x8x12xbf16>
    %12 = vector.shape_cast %11 : vector<1x8x12xbf16> to vector<8x12xbf16>
    %c0_15 = arith.constant 0 : index
    %c0_16 = arith.constant 0 : index
    %c0_17 = arith.constant 0 : index
    %c2_18 = arith.constant 2 : index
    %13 = vector.load %arg2[%c0_15, %c0_16, %c0_17, %c2_18] : memref<1x1x12x258xbf16, #tpu.memory_space<vmem>>, vector<1x1x12x256xbf16>
    %14 = vector.shape_cast %13 : vector<1x1x12x256xbf16> to vector<12x256xbf16>
    %cst_19 = arith.constant dense<0.000000e+00> : vector<8x256xf32>
    %15 = tpu.matmul %12, %14, %cst_19 {dimension_numbers = #tpu.dot_dimension_numbers<[1], [0], [0], [1], [0, 0, 1, 1], [], []>} : vector<8x12xbf16>, vector<12x256xbf16>, vector<8x256xf32> -> vector<8x256xf32>
    %16 = arith.addf %10, %15 : vector<8x256xf32>
    %c0_20 = arith.constant 0 : index
    %c0_21 = arith.constant 0 : index
    %17 = vector.load %arg4[%c0_20, %c0_21] : memref<8x1xf32, #tpu.memory_space<vmem>>, vector<8x1xf32>
    %18 = vector.broadcast %17 : vector<8x1xf32> to vector<8x256xf32>
    %19 = arith.addf %16, %18 : vector<8x256xf32>
    %c0_22 = arith.constant 0 : index
    %c0_23 = arith.constant 0 : index
    %c0_24 = arith.constant 0 : index
    %20 = vector.load %arg5[%c0_22, %c0_23, %c0_24] : memref<1x8x256xf32, #tpu.memory_space<vmem>>, vector<1x8x256xf32>
    %21 = vector.shape_cast %20 : vector<1x8x256xf32> to vector<8x256xf32>
    %22 = vector.shape_cast %19 : vector<8x256xf32> to vector<1x8x256xf32>
    tpu.vector_store %arg5[%c0_22, %c0_23, %c0_24], %22 {strides = array<i32>} : memref<1x8x256xf32, #tpu.memory_space<vmem>>, vector<1x8x256xf32>,
    return
  }
  func.func @transform_0(%arg0: i32, %arg1: i32) -> (i32, i32, i32, i32) {
    %c0_i32 = arith.constant 0 : i32
    %c0_i32_0 = arith.constant 0 : i32
    %c0_i32_1 = arith.constant 0 : i32
    return %arg0, %arg1, %c0_i32, %c0_i32_0 : i32, i32, i32, i32
  }
  func.func @transform_1(%arg0: i32, %arg1: i32) -> (i32, i32, i32) {
    %c0_i32 = arith.constant 0 : i32
    %c0_i32_0 = arith.constant 0 : i32
    %c0_i32_1 = arith.constant 0 : i32
    %c0_i32_2 = arith.constant 0 : i32
    return %c0_i32, %c0_i32_0, %c0_i32_1 : i32, i32, i32
  }
  func.func @transform_2(%arg0: i32, %arg1: i32) -> (i32, i32) {
    %c0_i32 = arith.constant 0 : i32
    %c0_i32_0 = arith.constant 0 : i32
    %c0_i32_1 = arith.constant 0 : i32
    return %c0_i32, %c0_i32_0 : i32, i32
  }
  func.func @transform_3(%arg0: i32, %arg1: i32) -> (i32, i32, i32) {
    %c0_i32 = arith.constant 0 : i32
    %c0_i32_0 = arith.constant 0 : i32
    return %arg0, %c0_i32, %arg1 : i32, i32, i32
  }
}

</mosaic_0001>

<llo_original>
// kernel: tpu_custom_call.1
$region0: #{tpu_custom_call.1}
  #allocation0 [shape = 'u32[]', space=smem, size = 0x4, offset = 0x4, fixed_abs, tag = 'smem constant byte address 0x4 - core index']
  #allocation1 [shape = 'u32[144,128]{1,0:T(1,128)}', space=vmem, size = 0x12000, scoped, tag = 'internal scratch']
  %s0 = inlined_call_operand.vmem [shape: bf16[2,2,12,258], index: 0, kind: input, shape index: {}]
  %s1 = inlined_call_operand.vmem [shape: bf16[3,8,12], index: 1, kind: input, shape index: {}]
  %s2 = inlined_call_operand.vmem [shape: f32[8,1], index: 2, kind: input, shape index: {}]
  %s3 = inlined_call_operand.hbm [shape: f32[2,8,512], index: 3, kind: output, shape index: {}]
  %s4 = sld [smem:[#allocation0]]
  $region45: #{tpu_custom_call.1} parent=0
    _
  %s6 = ssub.s32 1, %s4
  %s7 = scalar_select 0, %s6, %s4
  $region1: #{tpu_custom_call.1} parent=0
    #allocation2 [shape = 'u8[16384]{0}', space=vmem, size = 0x4000, scoped, tag = 'output window, operand 0']
    #allocation3 [shape = 's32[2]{0}', space=sflag, size = 0x8, scoped, tag = 'scoped memory for tpu_custom_call.1']
    %8 = vsyncpa [#allocation3], 0
    %s9 = scalar_lea.sflag [#allocation3], 1
    %10 = vsyncpa %s9, 0
    loop: start=0, step=1, limit=6
    $region2: #{tpu_custom_call.1} parent=1 // loop_pre_header
      _
    $region3: #{tpu_custom_call.1} parent=1 // loop_header
      %s12 = sphi 0, %s16
      %p13 = scmp.ge.s32.totalorder %s12, 6
      %s19 = sphi 0, %s31
      %s20 = sphi 0, %s27
      %s21 = sphi 0, %s19
      %s22 = sphi 0, %s20
      %s23 = sphi 0, %s21
      %s24 = sphi 0, %s22
      %s36 = sphi 0, %s38
      %s39 = sphi 0, %s36
      %s40 = sphi 0, %s39
      %s56 = sphi 0, %s40
      %s60 = sphi 0, %s60
      %s62 = sphi 0, %s60
      %s63 = sphi 0, %s62
      %s77 = sphi 0, %s63
      %s81 = sphi 0, %s81
      %s83 = sphi 0, %s81
      %s84 = sphi 0, %s83
      %s98 = sphi 0, %s84
      %s106 = sphi 0, %s108
      %s109 = sphi 0, %s106
      %s110 = sphi 0, %s109
      %s126 = sphi 0, %s110
    $region4: #{tpu_custom_call.1} parent=1 // loop_header_branch
      %15 = sbr.rel (%p13) target = $region8
    $region5: #{tpu_custom_call.1} parent=1 // loop_body
      %s17 = ssub.s32 %s12, 1
      %s18 = ssub.s32 %s12, 2
      %s25 = sadd.s32 1, %s20
      %p26 = scmp.ge.s32.totalorder %s25, 2
      %s27 = scalar_select %p26, 0, %s25
      %s28 = sadd.s32 1, %s19
      %s29 = scalar_select %p26, %s28, %s19
      %p30 = scmp.ge.s32.totalorder %s29, 2
      %s31 = scalar_select %p30, 0, %s29
      %s32 = ssub.s32 %s19, %s31
      %s33 = ssub.s32 %s20, %s27
      %s34 = sor.u32 %s32, %s33
      %p35 = scmp.eq.s32.totalorder %s34, 0
      %s37 = sadd.s32 %s36, 1
      %s38 = scalar_select %p35, %s36, %s37
      %p41 = pneg %p35
      %p42 = scmp.eq.s32.totalorder %s12, 3
      %p43 = por %p41, %p42
      %p44 = scmp.ne.s32.totalorder %s36, %s39
      %p45 = scmp.eq.s32.totalorder %s12, 0
      %p46 = por %p44, %p45
      %p47 = scmp.ne.s32.totalorder %s36, %s39
      %p48 = scmp.eq.s32.totalorder %s17, 3
      %p49 = por %p47, %p48
      %p50 = scmp.ne.s32.totalorder %s39, %s40
      %p51 = scmp.eq.s32.totalorder %s17, 0
      %p52 = por %p50, %p51
      %p53 = scmp.ne.s32.totalorder %s39, %s40
      %p54 = scmp.eq.s32.totalorder %s18, 3
      %p55 = por %p53, %p54
      %p57 = scmp.ne.s32.totalorder %s40, %s56
      %p58 = scmp.eq.s32.totalorder %s18, 0
      %p59 = por %p57, %p58
      %s61 = sadd.s32 %s60, 1
      %p64 = scmp.eq.s32.totalorder %s12, 3
      %p65 = scmp.ne.s32.totalorder %s60, %s62
      %p66 = scmp.eq.s32.totalorder %s12, 0
      %p67 = por %p65, %p66
      %p68 = scmp.ne.s32.totalorder %s60, %s62
      %p69 = scmp.eq.s32.totalorder %s17, 3
      %p70 = por %p68, %p69
      %p71 = scmp.ne.s32.totalorder %s62, %s63
      %p72 = scmp.eq.s32.totalorder %s17, 0
      %p73 = por %p71, %p72
      %p74 = scmp.ne.s32.totalorder %s62, %s63
      %p75 = scmp.eq.s32.totalorder %s18, 3
      %p76 = por %p74, %p75
      %p78 = scmp.ne.s32.totalorder %s63, %s77
      %p79 = scmp.eq.s32.totalorder %s18, 0
      %p80 = por %p78, %p79
      %s82 = sadd.s32 %s81, 1
      %p85 = scmp.eq.s32.totalorder %s12, 3
      %p86 = scmp.ne.s32.totalorder %s81, %s83
      %p87 = scmp.eq.s32.totalorder %s12, 0
      %p88 = por %p86, %p87
      %p89 = scmp.ne.s32.totalorder %s81, %s83
      %p90 = scmp.eq.s32.totalorder %s17, 3
      %p91 = por %p89, %p90
      %p92 = scmp.ne.s32.totalorder %s83, %s84
      %p93 = scmp.eq.s32.totalorder %s17, 0
      %p94 = por %p92, %p93
      %p95 = scmp.ne.s32.totalorder %s83, %s84
      %p96 = scmp.eq.s32.totalorder %s18, 3
      %p97 = por %p95, %p96
      %p99 = scmp.ne.s32.totalorder %s84, %s98
      %p100 = scmp.eq.s32.totalorder %s18, 0
      %p101 = por %p99, %p100
      %s102 = ssub.s32 %s19, %s31
      %s103 = ssub.s32 %s20, %s27
      %s104 = sor.u32 %s102, %s103
      %p105 = scmp.eq.s32.totalorder %s104, 0
      %s107 = sadd.s32 %s106, 1
      %s108 = scalar_select %p105, %s106, %s107
      %p111 = pneg %p105
      %p112 = scmp.eq.s32.totalorder %s12, 3
      %p113 = por %p111, %p112
      %p114 = scmp.ne.s32.totalorder %s106, %s109
      %p115 = scmp.eq.s32.totalorder %s12, 0
      %p116 = por %p114, %p115
      %p117 = scmp.ne.s32.totalorder %s106, %s109
      %p118 = scmp.eq.s32.totalorder %s17, 3
      %p119 = por %p117, %p118
      %p120 = scmp.ne.s32.totalorder %s109, %s110
      %p121 = scmp.eq.s32.totalorder %s17, 0
      %p122 = por %p120, %p121
      %p123 = scmp.ne.s32.totalorder %s109, %s110
      %p124 = scmp.eq.s32.totalorder %s18, 3
      %p125 = por %p123, %p124
      %p127 = scmp.ne.s32.totalorder %s110, %s126
      %p128 = scmp.eq.s32.totalorder %s18, 0
      %p129 = por %p127, %p128
      %p130 = scmp.le.s32.totalorder 1, %s12
      %p131 = scmp.lt.s32.totalorder %s12, 5
      %p132 = pnand %p130, %p131
      %p133 = pneg %p132
      // Predicated region
      $region9: #{tpu_custom_call.1} parent=5 // pred_check
        _
      $region10: #{tpu_custom_call.1} parent=5 // pred_check_branch
        %135 = sbr.rel (%p132) target = $region12
      $region11: #{tpu_custom_call.1} parent=5 // pred_region
        %s136 = ssub.s32 %s12, 1
        // Predicated region
        $region13: #{tpu_custom_call.1} parent=11 // pred_check
          %p137 = pneg %p73
        $region14: #{tpu_custom_call.1} parent=11 // pred_check_branch
          %139 = sbr.rel (%p137) target = $region16
        $region15: #{tpu_custom_call.1} parent=11 // pred_region
          _
        $region16: #{tpu_custom_call.1} parent=11 // pred_fallthru
          _
        // Predicated region
        $region17: #{tpu_custom_call.1} parent=11 // pred_check
          %p140 = pneg %p94
        $region18: #{tpu_custom_call.1} parent=11 // pred_check_branch
          %142 = sbr.rel (%p140) target = $region20
        $region19: #{tpu_custom_call.1} parent=11 // pred_region
          _
        $region20: #{tpu_custom_call.1} parent=11 // pred_fallthru
          _
      $region12: #{tpu_custom_call.1} parent=5 // pred_fallthru
        _
      %p143 = scmp.lt.s32.totalorder %s12, 4
      // Predicated region
      $region21: #{tpu_custom_call.1} parent=5 // pred_check
        %p144 = pneg %p143
      $region22: #{tpu_custom_call.1} parent=5 // pred_check_branch
        %146 = sbr.rel (%p144) target = $region24
      $region23: #{tpu_custom_call.1} parent=5 // pred_region
        // Predicated region
        $region25: #{tpu_custom_call.1} parent=23 // pred_check
          %p147 = pneg %p46
        $region26: #{tpu_custom_call.1} parent=23 // pred_check_branch
          %149 = sbr.rel (%p147) target = $region28
        $region27: #{tpu_custom_call.1} parent=23 // pred_region
          %p150 = scmp.lt.s32.totalorder %s19, 1
          %s151 = scalar_select %p150, %s19, 1
          %p152 = scmp.lt.s32.totalorder %s20, 1
          %s153 = scalar_select %p152, %s20, 1
          %s154 = smul.addr %s153, 6
          %s155 = smul.addr %s151, 12
          %s156 = sadd.s32 %s154, %s155
          %s157 = smul.addr %s156, 4
          %s158 = scalar_lea.vmem %s0, %s157
        $region28: #{tpu_custom_call.1} parent=23 // pred_fallthru
          _
      $region24: #{tpu_custom_call.1} parent=5 // pred_fallthru
        _
      %p159 = scmp.le.s32.totalorder 1, %s12
      %p160 = scmp.lt.s32.totalorder %s12, 5
      %p161 = pnand %p159, %p160
      %p162 = pneg %p161
      // Predicated region
      $region29: #{tpu_custom_call.1} parent=5 // pred_check
        _
      $region30: #{tpu_custom_call.1} parent=5 // pred_check_branch
        %164 = sbr.rel (%p161) target = $region32
      $region31: #{tpu_custom_call.1} parent=5 // pred_region
        %s165 = ssub.s32 %s12, 1
        %p166 = scmp.lt.s32.totalorder %s21, 1
        %s167 = scalar_select %p166, %s21, 1
        %p168 = scmp.lt.s32.totalorder %s22, 1
        %s169 = scalar_select %p168, %s22, 1
        %s170 = smul.addr %s169, 6
        %s171 = smul.addr %s167, 12
        %s172 = sadd.s32 %s170, %s171
        %s173 = smul.addr %s172, 4
        %s174 = scalar_lea.vmem %s0, %s173
        %p175 = pneg %p52
        %p176 = pneg %p49
        %p177 = pneg %p73
        %p178 = pneg %p70
        %p179 = pneg %p94
        %p180 = pneg %p91
        %p181 = pneg %p122
        %p182 = pneg %p119
        %s183 = sand.u32 %s109, 1
        %s184 = scalar_lea.sflag [#allocation3], %s183
        %s185 = sand.u32 %s109, 1
        %s186 = smul.addr %s185, 16
        %s187 = scalar_lea.vmem [#allocation2], %s186
        %p188 = scmp.lt.s32.totalorder %s21, 1
        %s189 = scalar_select %p188, %s21, 1
        %p190 = scmp.lt.s32.totalorder %s22, 1
        %s191 = scalar_select %p190, %s22, 1
        %s192 = smul.addr %s191, 6
        %s193 = smul.addr %s189, 12
        %s194 = sadd.s32 %s192, %s193
        %s195 = smul.addr %s194, 4
        %s196 = scalar_lea.vmem %s0, %s195
        %s197 = smul.u32 2, %s22
        %v199 = vld [vmem:[%s1] sm:$0xf]
        %v200 = vld [vmem:[%s196] sm:$0xff]
        %v201 = vld [vmem:[%s196 + $0xc] sm:$0x33]
        %s202 = scalar_lea.vmem %s1, 4
        %v203 = vld [vmem:[%s202] sm:$0xf]
        %v204 = vld [vmem:[%s196 + $0x8] sm:$0xf]
        %v205 = vld [vmem:[%s196 + $0x14] sm:$0x3]
        %v210 = vunpack.c.l.b16 %v200
        %v211 = vunpack.c.h.b16 %v200
        %v212 = vunpack.c.l.b16 %v204
        %v213 = vunpack.c.l.b16 %v201
        %v214 = vunpack.c.h.b16 %v201
        %v215 = vunpack.c.l.b16 %v205
        %v216 = vpack.c.b16 %v213, %v210
        %v217 = vpack.c.b16 %v214, %v211
        %v218 = vpack.c.b16 %v215, %v212
        %219 = vrot.lane.b32.xlu0 %v216, 127
        %v220 = vpop.permute.xlu0 %219
        %221 = vrot.lane.b32.xlu0 %v217, 127
        %v222 = vpop.permute.xlu0 %221
        %223 = vrot.lane.b32.xlu0 %v218, 127
        %v224 = vpop.permute.xlu0 %223
        %vm225 = vcmask 1039360
        %v226 = vsel %vm225, %v220, %v222
        %v227 = vsel %vm225, %v222, %v224
        %vm228 = vcmask 97280
        %v230 = vsel %vm228, %v203, 0
        %vm232 = vcmask 1045504
        %v234 = vsel %vm232, %v226, 0
        %v237 = vsel %vm232, %v227, 0
        %239 = vmatprep.subr.bf16.mxu0 0
        %240 = vmatpush1.bf16.msra.mxu0 0
        %241 = vmatprep.subr.bf16.mxu0 0
        %242 = vmatpush1.bf16.msra.mxu0 0
        %243 = vmatprep.subr.bf16.mxu0 0
        %244 = vmatpush1.bf16.msra.mxu0 0
        %245 = vmatprep.subr.bf16.mxu0 0
        %246 = vmatpush1.bf16.msra.mxu0 0
        %247 = vmatprep.subr.bf16.mxu0 0
        %248 = vmatpush1.bf16.msra.mxu0 0
        %249 = vmatprep.subr.bf16.mxu0 0
        %250 = vmatpush1.bf16.msra.mxu0 0
        %251 = vmatprep.subr.bf16.mxu0 0
        %252 = vmatpush1.bf16.msra.mxu0 0
        %253 = vmatprep.subr.bf16.mxu0 %v237
        %254 = vmatpush1.bf16.msra.mxu0 %v234
        %255 = vmatprep.subr.bf16.mxu0 0
        %256 = vmatpush2.bf16.msra.mxu0 0
        %257 = vmatprep.subr.bf16.mxu0 0
        %258 = vmatpush2.bf16.msra.mxu0 0
        %259 = vmatprep.subr.bf16.mxu0 0
        %260 = vmatpush2.bf16.msra.mxu0 0
        %261 = vmatprep.subr.bf16.mxu0 0
        %262 = vmatpush2.bf16.msra.mxu0 0
        %263 = vmatprep.subr.bf16.mxu0 0
        %264 = vmatpush2.bf16.msra.mxu0 0
        %265 = vmatprep.subr.bf16.mxu0 0
        %266 = vmatpush2.bf16.msra.mxu0 0
        %267 = vmatprep.subr.bf16.mxu0 0
        %268 = vmatpush2.bf16.msra.mxu0 0
        %269 = vmatprep.subr.bf16.mxu0 0
        %270 = vmatpush2.bf16.msra.mxu0 0
        %271 = vmatprep.mubr.bf16.mxu0 0
        %272 = vmatmul.mubr.bf16.gmra.mxu0 %v230
        %v273 = vpop.f32.mrf.mxu0
        %v274 = vadd.f32 0.0, %v273
        %v275 = vpop.f32.mrf.mxu0
        %v276 = vadd.f32 0.0, %v275
        %v277 = vpop.f32.mrf.mxu0
        %v278 = vpop.f32.mrf.mxu0
        %279 = vdwg.mxu0
        %v281 = vsel %vm228, %v199, 0
        %v284 = vsel %vm232, %v216, 0
        %v287 = vsel %vm232, %v217, 0
        %289 = vmatprep.subr.bf16.mxu0 0
        %290 = vmatpush1.bf16.msra.mxu0 0
        %291 = vmatprep.subr.bf16.mxu0 0
        %292 = vmatpush1.bf16.msra.mxu0 0
        %293 = vmatprep.subr.bf16.mxu0 0
        %294 = vmatpush1.bf16.msra.mxu0 0
        %295 = vmatprep.subr.bf16.mxu0 0
        %296 = vmatpush1.bf16.msra.mxu0 0
        %297 = vmatprep.subr.bf16.mxu0 0
        %298 = vmatpush1.bf16.msra.mxu0 0
        %299 = vmatprep.subr.bf16.mxu0 0
        %300 = vmatpush1.bf16.msra.mxu0 0
        %301 = vmatprep.subr.bf16.mxu0 0
        %302 = vmatpush1.bf16.msra.mxu0 0
        %303 = vmatprep.subr.bf16.mxu0 %v287
        %304 = vmatpush1.bf16.msra.mxu0 %v284
        %305 = vmatprep.subr.bf16.mxu0 0
        %306 = vmatpush2.bf16.msra.mxu0 0
        %307 = vmatprep.subr.bf16.mxu0 0
        %308 = vmatpush2.bf16.msra.mxu0 0
        %309 = vmatprep.subr.bf16.mxu0 0
        %310 = vmatpush2.bf16.msra.mxu0 0
        %311 = vmatprep.subr.bf16.mxu0 0
        %312 = vmatpush2.bf16.msra.mxu0 0
        %313 = vmatprep.subr.bf16.mxu0 0
        %314 = vmatpush2.bf16.msra.mxu0 0
        %315 = vmatprep.subr.bf16.mxu0 0
        %316 = vmatpush2.bf16.msra.mxu0 0
        %317 = vmatprep.subr.bf16.mxu0 0
        %318 = vmatpush2.bf16.msra.mxu0 0
        %319 = vmatprep.subr.bf16.mxu0 0
        %320 = vmatpush2.bf16.msra.mxu0 0
        %321 = vmatprep.mubr.bf16.mxu0 0
        %322 = vmatmul.mubr.bf16.gmra.mxu0 %v281
        %v323 = vpop.f32.mrf.mxu0
        %v324 = vadd.f32 %v274, %v323
        %v325 = vpop.f32.mrf.mxu0
        %v326 = vadd.f32 %v276, %v325
        %v327 = vpop.f32.mrf.mxu0
        %v328 = vpop.f32.mrf.mxu0
        %329 = vdwg.mxu0
        %s330 = scalar_lea.vmem %s1, 8
        %v331 = vld [vmem:[%s330] sm:$0xf]
        %332 = vrot.lane.b32.xlu0 %v216, 126
        %v333 = vpop.permute.xlu0 %332
        %334 = vrot.lane.b32.xlu0 %v217, 126
        %v335 = vpop.permute.xlu0 %334
        %336 = vrot.lane.b32.xlu0 %v218, 126
        %v337 = vpop.permute.xlu0 %336
        %vm338 = vcmask 1031168
        %v339 = vsel %vm338, %v333, %v335
        %v340 = vsel %vm338, %v335, %v337
        %v342 = vsel %vm228, %v331, 0
        %v345 = vsel %vm232, %v339, 0
        %v348 = vsel %vm232, %v340, 0
        %350 = vmatprep.subr.bf16.mxu0 0
        %351 = vmatpush1.bf16.msra.mxu0 0
        %352 = vmatprep.subr.bf16.mxu0 0
        %353 = vmatpush1.bf16.msra.mxu0 0
        %354 = vmatprep.subr.bf16.mxu0 0
        %355 = vmatpush1.bf16.msra.mxu0 0
        %356 = vmatprep.subr.bf16.mxu0 0
        %357 = vmatpush1.bf16.msra.mxu0 0
        %358 = vmatprep.subr.bf16.mxu0 0
        %359 = vmatpush1.bf16.msra.mxu0 0
        %360 = vmatprep.subr.bf16.mxu0 0
        %361 = vmatpush1.bf16.msra.mxu0 0
        %362 = vmatprep.subr.bf16.mxu0 0
        %363 = vmatpush1.bf16.msra.mxu0 0
        %364 = vmatprep.subr.bf16.mxu0 %v348
        %365 = vmatpush1.bf16.msra.mxu0 %v345
        %366 = vmatprep.subr.bf16.mxu0 0
        %367 = vmatpush2.bf16.msra.mxu0 0
        %368 = vmatprep.subr.bf16.mxu0 0
        %369 = vmatpush2.bf16.msra.mxu0 0
        %370 = vmatprep.subr.bf16.mxu0 0
        %371 = vmatpush2.bf16.msra.mxu0 0
        %372 = vmatprep.subr.bf16.mxu0 0
        %373 = vmatpush2.bf16.msra.mxu0 0
        %374 = vmatprep.subr.bf16.mxu0 0
        %375 = vmatpush2.bf16.msra.mxu0 0
        %376 = vmatprep.subr.bf16.mxu0 0
        %377 = vmatpush2.bf16.msra.mxu0 0
        %378 = vmatprep.subr.bf16.mxu0 0
        %379 = vmatpush2.bf16.msra.mxu0 0
        %380 = vmatprep.subr.bf16.mxu0 0
        %381 = vmatpush2.bf16.msra.mxu0 0
        %382 = vmatprep.mubr.bf16.mxu0 0
        %383 = vmatmul.mubr.bf16.gmra.mxu0 %v342
        %v384 = vpop.f32.mrf.mxu0
        %v385 = vadd.f32 0.0, %v384
        %v386 = vpop.f32.mrf.mxu0
        %v387 = vadd.f32 0.0, %v386
        %v388 = vpop.f32.mrf.mxu0
        %v389 = vpop.f32.mrf.mxu0
        %390 = vdwg.mxu0
        %v391 = vadd.f32 %v324, %v385
        %v392 = vadd.f32 %v326, %v387
        %v393 = vld [vmem:[%s2] sm:$0xff]
        %395 = vset.pattern.permute.xlu0 0
        %396 = vperm.xlu0 %395, %v393
        %v397 = vpop.permute.xlu0 %396
        %v399 = vadd.f32 %v391, %v397
        %v400 = vadd.f32 %v392, %v397
        %401 = vst [vmem:[%s187] sm:$0xff] %v399
        %402 = vst [vmem:[%s187 + $0x8] sm:$0xff] %v400
        %s403 = sand.u32 %s109, 1
        %s404 = scalar_lea.sflag [#allocation3], %s403
        %s405 = sand.u32 %s109, 1
        %s406 = smul.addr %s405, 16
        %s407 = scalar_lea.vmem [#allocation2], %s406
        // Predicated region
        $region33: #{tpu_custom_call.1} parent=31 // pred_check
          %p408 = pneg %p119
        $region34: #{tpu_custom_call.1} parent=31 // pred_check_branch
          %410 = sbr.rel (%p408) target = $region36
        $region35: #{tpu_custom_call.1} parent=31 // pred_region
          %s411 = smul.u32 2, %s22
          %s413 = ssub.s32 256, 256
          %414 = vsyncadd %s404, %s413
          %s415 = smul.addr %s21, 4
          %s416 = sadd.s32 %s411, %s415
          %s417 = smul.addr %s416, 128
          %s418 = scalar_lea.hbm %s3, %s417
          %s420 = sshll.u32 %s407, 4
          %s421 = int_to_ptr.vmem [resolvable:$true] %s420
          %423 = dma.vmem_to_hbm [thread:$0]  %s421, 256, %s418, %s404
        $region36: #{tpu_custom_call.1} parent=31 // pred_fallthru
          _
      $region32: #{tpu_custom_call.1} parent=5 // pred_fallthru
        _
      %p424 = scmp.le.s32.totalorder 2, %s12
      // Predicated region
      $region37: #{tpu_custom_call.1} parent=5 // pred_check
        %p425 = pneg %p424
      $region38: #{tpu_custom_call.1} parent=5 // pred_check_branch
        %427 = sbr.rel (%p425) target = $region40
      $region39: #{tpu_custom_call.1} parent=5 // pred_region
        %s428 = ssub.s32 %s12, 2
        // Predicated region
        $region41: #{tpu_custom_call.1} parent=39 // pred_check
          %p429 = pneg %p125
        $region42: #{tpu_custom_call.1} parent=39 // pred_check_branch
          %431 = sbr.rel (%p429) target = $region44
        $region43: #{tpu_custom_call.1} parent=39 // pred_region
          %s432 = sand.u32 %s110, 1
          %s433 = scalar_lea.sflag [#allocation3], %s432
          %s434 = sand.u32 %s110, 1
          %s435 = smul.addr %s434, 16
          %s436 = scalar_lea.vmem [#allocation2], %s435
          %437 = dma.done %s433, 256
        $region44: #{tpu_custom_call.1} parent=39 // pred_fallthru
          _
      $region40: #{tpu_custom_call.1} parent=5 // pred_fallthru
        _
    $region6: #{tpu_custom_call.1} parent=1 // loop_footer
      %s16 = sadd.s32 1, %s12
    $region7: #{tpu_custom_call.1} parent=1 // loop_footer_branch
      %11 = sbr.rel target = $region3
    $region8: #{tpu_custom_call.1} parent=1 // loop_exit
      _
    %438 = vsyncpa [#allocation3], 1
    %s439 = scalar_lea.sflag [#allocation3], 1
    %440 = vsyncpa %s439, 1

</llo_original>
